<compile_context>
chip_gen: v7x
topology: tpu7x:2x2x1
jax: 0.10.0
libtpu: 0.0.40
codegen_flags: <defaults>
</compile_context>

<pallas_src>
import functools

import jax
import jax.numpy as jnp
from jax.experimental import pallas as pl
from jax.experimental.pallas import tpu as pltpu


# ----------------------------------------------------------------------------- helpers
def _round_up(x, m):
    return (x + m - 1) // m * m


def _cdiv(a, b):
    return (a + b - 1) // b


def _vmem_capacity_bytes():
    """Physical VMEM per TensorCore (best effort); conservative fallback."""
    try:
        cap = getattr(pltpu.get_tpu_info(), "vmem_capacity_bytes", None)
        if cap:
            return int(cap)
    except Exception:
        pass
    return 64 * 1024 * 1024            # v7x per-TC size: safe everywhere


def _mxu_feature_alignment():
    """256-deep contractions fill the v6e/v7x MXU; v5e's MXUs are 128-wide."""
    try:
        ver = str(getattr(pltpu.get_tpu_info(), "chip_version", ""))
        if ("6" in ver) or ("7" in ver):
            return 256
    except Exception:
        pass
    return 128


def _pad_dim(d, align):
    if align > 128 and d >= align:
        return _round_up(d, align)
    return _round_up(d, 128)


def _estimate_vmem_bytes(tb, d_in, dims_p, weight_bytes):
    x_tile = 2 * tb * d_in * 4                       # double-buffered f32 input tile
    out_tile = 2 * tb * 4
    max_dp = max(dims_p) if dims_p else 128
    act = 4 * tb * max_dp * 4                        # generous f32 working-set estimate
    return x_tile + out_tile + act + weight_bytes


def _choose_batch_tile(b, block_b, d_in, dims_p, weight_bytes, vmem_limit):
    n_tiles = max(1, _cdiv(b, max(block_b, 8)))
    if n_tiles == 1 and b >= 256:
        n_tiles = 2                                  # >=2 tiles -> both v7x TCs get work
    tb = _round_up(_cdiv(b, n_tiles), 8)             # minimal dead-tail tile
    while tb > 8 and _estimate_vmem_bytes(tb, d_in, dims_p, weight_bytes) > vmem_limit:
        tb = max(8, _round_up(tb // 2, 8))           # shrink until it fits the VMEM budget
    g = _cdiv(b, tb)
    return tb, g, g * tb


# ----------------------------------------------------------------------------- kernel
def _mlp_kernel(n_hidden, x_ref, *refs):
    """One batch tile of the full forward pass.

    refs layout:
      [wT_0, b_0, ..., wT_{N-1}, b_{N-1},   # (D_i(p), D_{i+1}p) bf16, (1, D_{i+1}p) f32
       w_out,                               # (1, D_Np) f32 row (bias-free head)
       o_ref]                               # (TB, 1)   f32
    """
    o_ref = refs[-1]
    w_out_ref = refs[-2]
    layer_refs = refs[:-2]

    h = x_ref[...].astype(jnp.bfloat16)                                  # (TB, D_0) bf16
    for i in range(n_hidden):
        w_ref = layer_refs[2 * i]
        b_ref = layer_refs[2 * i + 1]
        pre = jnp.dot(h, w_ref[...], preferred_element_type=jnp.float32)  # MXU, f32 acc
        pre = pre + b_ref[...]                                            # VPU bias add
        act = pl.reciprocal(1.0 + jnp.exp(-pre), approx=True)             # EUP exp + rcp
        # bf16 between layers halves vreg/VMEM traffic; keep f32 for the head reduce.
        h = act.astype(jnp.bfloat16) if i + 1 < n_hidden else act

    prod = h * w_out_ref[...]                                             # (TB, D_Np) f32
    o_ref[...] = jnp.sum(prod, axis=1, keepdims=True).astype(o_ref.dtype)  # XLU reduce


# ----------------------------------------------------------------------------- wrapper
def mlp_forward(x, weights, biases, w_out, *, block_b=None):
    """MLP forward pass in a single pallas_call.

    x:       (B, D_in) float32/bfloat16
    weights: list of (D_{i+1}, D_i) float32   (PyTorch Linear convention)
    biases:  list of (D_{i+1},)     float32
    w_out:   (1, D_last)            float32   (bias-free head)
    returns: (B, 1) float32
    """
    x = jnp.asarray(x)
    if x.dtype not in (jnp.float32, jnp.bfloat16):
        x = x.astype(jnp.float32)
    B, d_in = x.shape
    n_hidden = len(weights)

    # --- generation-aware budgets / alignment --------------------------------
    vmem_cap = _vmem_capacity_bytes()
    vmem_limit = (vmem_cap * 3) // 4                 # headroom for internal scratch
    if block_b is None:
        block_b = 1024 if vmem_cap > (96 << 20) else 512   # v6e/v5e vs v7x
    feat_align = _mxu_feature_alignment()

    dims = [d_in] + [int(w.shape[0]) for w in weights]
    # x's feature dim stays unpadded (block == full dim); hidden widths are padded so
    # every contraction after layer 0 is lane/sublane aligned.
    dims_p = [d_in] + [_pad_dim(d, feat_align) for d in dims[1:]]

    # --- wrapper-side weight prep (small, one-time) ---------------------------
    wT_ps, b_ps = [], []
    for i, (w, b) in enumerate(zip(weights, biases)):
        d_i, d_o = dims[i], dims[i + 1]
        dp_i, dp_o = dims_p[i], dims_p[i + 1]
        w_t = jnp.asarray(w, jnp.float32).T                               # (d_i, d_o)
        w_p = jnp.pad(w_t, ((0, dp_i - d_i), (0, dp_o - d_o))).astype(jnp.bfloat16)
        b_p = jnp.pad(jnp.asarray(b, jnp.float32), (0, dp_o - d_o))[None, :]  # (1, dp_o)
        wT_ps.append(w_p)
        b_ps.append(b_p)
    w_out_row = jnp.pad(jnp.asarray(w_out, jnp.float32),
                        ((0, 0), (0, dims_p[-1] - dims[-1])))             # (1, dp_N) f32

    weight_bytes = sum(w.size * 2 + b.size * 4 for w, b in zip(wT_ps, b_ps)) \
        + w_out_row.size * 4
    weight_bytes *= 2        # conservative: assume double-buffered if Buffered(1) falls back

    TB, G, B_pad = _choose_batch_tile(B, block_b, d_in, dims_p, weight_bytes, vmem_limit)

    # Only the (rare, small) batch tail is padded; no feature pad / transpose of x.
    x_in = x if B_pad == B else jnp.pad(x, ((0, B_pad - B), (0, 0)))

    operands = [x_in]
    for w_p, b_p in zip(wT_ps, b_ps):
        operands += [w_p, b_p]
    operands.append(w_out_row)

    # --- cost estimate --------------------------------------------------------
    flops, trans = 0, 0
    for i in range(n_hidden):
        flops += 2 * B_pad * dims_p[i] * dims_p[i + 1]
        trans += 2 * B_pad * dims_p[i + 1]           # exp + approx reciprocal per element
    flops += 2 * B_pad * dims_p[-1]                  # head multiply + reduce
    bytes_accessed = (x_in.size * x_in.dtype.itemsize + B_pad * 4
                      + sum(o.size * o.dtype.itemsize for o in operands[1:]))
    cost = pl.CostEstimate(flops=int(flops), transcendentals=int(trans),
                           bytes_accessed=int(bytes_accessed))

    kernel = functools.partial(_mlp_kernel, n_hidden)

    def run(single_buffer_weights):
        def const_spec(shape):
            if single_buffer_weights:
                return pl.BlockSpec(shape, lambda i: (0, 0),
                                    pipeline_mode=pl.Buffered(1))   # resident, 1 buffer
            return pl.BlockSpec(shape, lambda i: (0, 0))
        in_specs = [pl.BlockSpec((TB, d_in), lambda i: (i, 0))]     # x: batch-tiled, pipelined
        for w_p, b_p in zip(wT_ps, b_ps):
            in_specs += [const_spec(w_p.shape), const_spec(b_p.shape)]
        in_specs.append(const_spec(w_out_row.shape))
        return pl.pallas_call(
            kernel,
            out_shape=jax.ShapeDtypeStruct((B_pad, 1), jnp.float32),
            grid=(G,),
            in_specs=in_specs,
            out_specs=pl.BlockSpec((TB, 1), lambda i: (i, 0)),
            compiler_params=pltpu.CompilerParams(
                dimension_semantics=("parallel",),       # shard batch tiles across TCs
                vmem_limit_bytes=int(vmem_limit)),
            cost_estimate=cost,
        )(*operands)

    try:
        out = run(True)       # single-buffered resident weights (pl.Buffered(1))
    except Exception:
        out = run(False)      # fallback: default pipelining if Buffered(1) unsupported

    return out[:B]            # (B, 1) float32, matches PyTorch


# ----------------------------------------------------------------------------- reference
def _init_params(key, layer_widths, std=0.1):
    """Deterministic gaussian weights / zero biases (mirrors MLP.init_gaussian)."""
    weights, biases = [], []
    n_layers = len(layer_widths) - 1
    keys = jax.random.split(key, n_layers + 1)
    for i in range(n_layers):
        d_in, d_out = layer_widths[i], layer_widths[i + 1]
        weights.append(std * jax.random.normal(keys[i], (d_out, d_in), jnp.float32))
        biases.append(jnp.zeros((d_out,), jnp.float32))
    w_out = std * jax.random.normal(keys[-1], (1, layer_widths[-1]), jnp.float32)
    return weights, biases, w_out


def _reference_forward(x, weights, biases, w_out):
    h = x
    for w, b in zip(weights, biases):
        h = jax.nn.sigmoid(h @ w.T + b)
    return h @ w_out.T


if __name__ == "__main__":
    # layer_widths = [D_in, D_hidden_1, D_hidden_2]; final layer maps to a scalar.
    layer_widths = [16, 32, 32]
    batch = 8

    key = jax.random.PRNGKey(0)
    key_x, key_p = jax.random.split(key)

    x = jax.random.normal(key_x, (batch, layer_widths[0]), jnp.float32)
    weights, biases, w_out = _init_params(key_p, layer_widths, std=0.1)

    out = mlp_forward(x, weights, biases, w_out)
    out = jax.block_until_ready(out)

    ref = _reference_forward(x, weights, biases, w_out)
    assert out.shape == (batch, 1), out.shape
    # bf16 MXU inputs + approx-reciprocal sigmoid vs f32 reference: small tolerance.
    assert jnp.allclose(out, ref, atol=1e-2, rtol=1e-2), (out, ref)

    print("KERNEL_OK")
</pallas_src>

<mosaic_0001>
module attributes {stable_mosaic.version = 11 : i64} {
  func.func @_mlp_kernel(%arg0: i32, %arg1: memref<8x16xf32, #tpu.memory_space<vmem>>, %arg2: memref<16x128xbf16, #tpu.memory_space<vmem>>, %arg3: memref<1x128xf32, #tpu.memory_space<vmem>>, %arg4: memref<128x128xbf16, #tpu.memory_space<vmem>>, %arg5: memref<1x128xf32, #tpu.memory_space<vmem>>, %arg6: memref<1x128xf32, #tpu.memory_space<vmem>>, %arg7: memref<8x1xf32, #tpu.memory_space<vmem>>) attributes {dimension_semantics = [#tpu.dimension_semantics<parallel>], iteration_bounds = array<i64: 1>, scalar_prefetch = 0 : i64, scratch_operands = 0 : i64, tpu.core_type = #tpu.core_type<tc>, window_params = [{transform_indices = @transform_0, window_bounds = array<i64: 8, 16>}, {pipeline_mode = #tpu.pipeline_mode<synchronous>, transform_indices = @transform_1, window_bounds = array<i64: 16, 128>}, {pipeline_mode = #tpu.pipeline_mode<synchronous>, transform_indices = @transform_2, window_bounds = array<i64: 1, 128>}, {pipeline_mode = #tpu.pipeline_mode<synchronous>, transform_indices = @transform_3, window_bounds = array<i64: 128, 128>}, {pipeline_mode = #tpu.pipeline_mode<synchronous>, transform_indices = @transform_4, window_bounds = array<i64: 1, 128>}, {pipeline_mode = #tpu.pipeline_mode<synchronous>, transform_indices = @transform_5, window_bounds = array<i64: 1, 128>}, {transform_indices = @transform_6, window_bounds = array<i64: 8, 1>}]} {
    %c0 = arith.constant 0 : index
    %c0_0 = arith.constant 0 : index
    %0 = vector.load %arg1[%c0, %c0_0] : memref<8x16xf32, #tpu.memory_space<vmem>>, vector<8x16xf32>
    %1 = arith.truncf %0 : vector<8x16xf32> to vector<8x16xbf16>
    %c0_1 = arith.constant 0 : index
    %c0_2 = arith.constant 0 : index
    %2 = vector.load %arg2[%c0_1, %c0_2] : memref<16x128xbf16, #tpu.memory_space<vmem>>, vector<16x128xbf16>
    %cst = arith.constant dense<0.000000e+00> : vector<8x128xf32>
    %3 = tpu.matmul %1, %2, %cst {dimension_numbers = #tpu.dot_dimension_numbers<[1], [0], [0], [1], [0, 0, 1, 1], [], []>} : vector<8x16xbf16>, vector<16x128xbf16>, vector<8x128xf32> -> vector<8x128xf32>
    %c0_3 = arith.constant 0 : index
    %c0_4 = arith.constant 0 : index
    %4 = vector.load %arg3[%c0_3, %c0_4] : memref<1x128xf32, #tpu.memory_space<vmem>>, vector<1x128xf32>
    %5 = vector.broadcast %4 : vector<1x128xf32> to vector<8x128xf32>
    %6 = arith.addf %3, %5 : vector<8x128xf32>
    %cst_5 = arith.constant 0.000000e+00 : f32
    %7 = vector.broadcast %cst_5 : f32 to vector<8x128xf32>
    %8 = arith.subf %7, %6 : vector<8x128xf32>
    %9 = math.exp %8 : vector<8x128xf32>
    %cst_6 = arith.constant 1.000000e+00 : f32
    %10 = vector.broadcast %cst_6 : f32 to vector<8x128xf32>
    %11 = arith.addf %10, %9 : vector<8x128xf32>
    %12 = tpu.reciprocal %11 {approx = true} : vector<8x128xf32> -> vector<8x128xf32>
    %13 = arith.truncf %12 : vector<8x128xf32> to vector<8x128xbf16>
    %c0_7 = arith.constant 0 : index
    %c0_8 = arith.constant 0 : index
    %14 = vector.load %arg4[%c0_7, %c0_8] : memref<128x128xbf16, #tpu.memory_space<vmem>>, vector<128x128xbf16>
    %cst_9 = arith.constant dense<0.000000e+00> : vector<8x128xf32>
    %15 = tpu.matmul %13, %14, %cst_9 {dimension_numbers = #tpu.dot_dimension_numbers<[1], [0], [0], [1], [0, 0, 1, 1], [], []>} : vector<8x128xbf16>, vector<128x128xbf16>, vector<8x128xf32> -> vector<8x128xf32>
    %c0_10 = arith.constant 0 : index
    %c0_11 = arith.constant 0 : index
    %16 = vector.load %arg5[%c0_10, %c0_11] : memref<1x128xf32, #tpu.memory_space<vmem>>, vector<1x128xf32>
    %17 = vector.broadcast %16 : vector<1x128xf32> to vector<8x128xf32>
    %18 = arith.addf %15, %17 : vector<8x128xf32>
    %cst_12 = arith.constant 0.000000e+00 : f32
    %19 = vector.broadcast %cst_12 : f32 to vector<8x128xf32>
    %20 = arith.subf %19, %18 : vector<8x128xf32>
    %21 = math.exp %20 : vector<8x128xf32>
    %cst_13 = arith.constant 1.000000e+00 : f32
    %22 = vector.broadcast %cst_13 : f32 to vector<8x128xf32>
    %23 = arith.addf %22, %21 : vector<8x128xf32>
    %24 = tpu.reciprocal %23 {approx = true} : vector<8x128xf32> -> vector<8x128xf32>
    %c0_14 = arith.constant 0 : index
    %c0_15 = arith.constant 0 : index
    %25 = vector.load %arg6[%c0_14, %c0_15] : memref<1x128xf32, #tpu.memory_space<vmem>>, vector<1x128xf32>
    %26 = vector.broadcast %25 : vector<1x128xf32> to vector<8x128xf32>
    %27 = arith.mulf %24, %26 : vector<8x128xf32>
    %cst_16 = arith.constant dense<0.000000e+00> : vector<8xf32>
    %28 = vector.multi_reduction <add>, %27, %cst_16 [1] : vector<8x128xf32> to vector<8xf32>
    %29 = vector.shape_cast %28 : vector<8xf32> to vector<8x1xf32>
    %c0_17 = arith.constant 0 : index
    %c0_18 = arith.constant 0 : index
    %30 = vector.load %arg7[%c0_17, %c0_18] : memref<8x1xf32, #tpu.memory_space<vmem>>, vector<8x1xf32>
    tpu.vector_store %arg7[%c0_17, %c0_18], %29 {strides = array<i32>} : memref<8x1xf32, #tpu.memory_space<vmem>>, vector<8x1xf32>,
    return
  }
  func.func @transform_0(%arg0: i32) -> (i32, i32) {
    %c0_i32 = arith.constant 0 : i32
    %c0_i32_0 = arith.constant 0 : i32
    return %arg0, %c0_i32 : i32, i32
  }
  func.func @transform_1(%arg0: i32) -> (i32, i32) {
    %c0_i32 = arith.constant 0 : i32
    %c0_i32_0 = arith.constant 0 : i32
    %c0_i32_1 = arith.constant 0 : i32
    return %c0_i32, %c0_i32_0 : i32, i32
  }
  func.func @transform_2(%arg0: i32) -> (i32, i32) {
    %c0_i32 = arith.constant 0 : i32
    %c0_i32_0 = arith.constant 0 : i32
    %c0_i32_1 = arith.constant 0 : i32
    return %c0_i32, %c0_i32_0 : i32, i32
  }
  func.func @transform_3(%arg0: i32) -> (i32, i32) {
    %c0_i32 = arith.constant 0 : i32
    %c0_i32_0 = arith.constant 0 : i32
    %c0_i32_1 = arith.constant 0 : i32
    return %c0_i32, %c0_i32_0 : i32, i32
  }
  func.func @transform_4(%arg0: i32) -> (i32, i32) {
    %c0_i32 = arith.constant 0 : i32
    %c0_i32_0 = arith.constant 0 : i32
    %c0_i32_1 = arith.constant 0 : i32
    return %c0_i32, %c0_i32_0 : i32, i32
  }
  func.func @transform_5(%arg0: i32) -> (i32, i32) {
    %c0_i32 = arith.constant 0 : i32
    %c0_i32_0 = arith.constant 0 : i32
    %c0_i32_1 = arith.constant 0 : i32
    return %c0_i32, %c0_i32_0 : i32, i32
  }
  func.func @transform_6(%arg0: i32) -> (i32, i32) {
    %c0_i32 = arith.constant 0 : i32
    %c0_i32_0 = arith.constant 0 : i32
    return %arg0, %c0_i32 : i32, i32
  }
}

module attributes {stable_mosaic.version = 11 : i64} {
  func.func @_mlp_kernel(%arg0: i32, %arg1: memref<8x16xf32, #tpu.memory_space<vmem>>, %arg2: memref<16x128xbf16, #tpu.memory_space<vmem>>, %arg3: memref<1x128xf32, #tpu.memory_space<vmem>>, %arg4: memref<128x128xbf16, #tpu.memory_space<vmem>>, %arg5: memref<1x128xf32, #tpu.memory_space<vmem>>, %arg6: memref<1x128xf32, #tpu.memory_space<vmem>>, %arg7: memref<8x1xf32, #tpu.memory_space<vmem>>) attributes {dimension_semantics = [#tpu.dimension_semantics<parallel>], iteration_bounds = array<i64: 1>, scalar_prefetch = 0 : i64, scratch_operands = 0 : i64, tpu.core_type = #tpu.core_type<tc>, window_params = [{transform_indices = @transform_0, window_bounds = array<i64: 8, 16>}, {pipeline_mode = #tpu.pipeline_mode<synchronous>, transform_indices = @transform_1, window_bounds = array<i64: 16, 128>}, {pipeline_mode = #tpu.pipeline_mode<synchronous>, transform_indices = @transform_2, window_bounds = array<i64: 1, 128>}, {pipeline_mode = #tpu.pipeline_mode<synchronous>, transform_indices = @transform_3, window_bounds = array<i64: 128, 128>}, {pipeline_mode = #tpu.pipeline_mode<synchronous>, transform_indices = @transform_4, window_bounds = array<i64: 1, 128>}, {pipeline_mode = #tpu.pipeline_mode<synchronous>, transform_indices = @transform_5, window_bounds = array<i64: 1, 128>}, {transform_indices = @transform_6, window_bounds = array<i64: 8, 1>}]} {
    %c0 = arith.constant 0 : index
    %c0_0 = arith.constant 0 : index
    %0 = vector.load %arg1[%c0, %c0_0] : memref<8x16xf32, #tpu.memory_space<vmem>>, vector<8x16xf32>
    %1 = arith.truncf %0 : vector<8x16xf32> to vector<8x16xbf16>
    %c0_1 = arith.constant 0 : index
    %c0_2 = arith.constant 0 : index
    %2 = vector.load %arg2[%c0_1, %c0_2] : memref<16x128xbf16, #tpu.memory_space<vmem>>, vector<16x128xbf16>
    %cst = arith.constant dense<0.000000e+00> : vector<8x128xf32>
    %3 = tpu.matmul %1, %2, %cst {dimension_numbers = #tpu.dot_dimension_numbers<[1], [0], [0], [1], [0, 0, 1, 1], [], []>} : vector<8x16xbf16>, vector<16x128xbf16>, vector<8x128xf32> -> vector<8x128xf32>
    %c0_3 = arith.constant 0 : index
    %c0_4 = arith.constant 0 : index
    %4 = vector.load %arg3[%c0_3, %c0_4] : memref<1x128xf32, #tpu.memory_space<vmem>>, vector<1x128xf32>
    %5 = vector.broadcast %4 : vector<1x128xf32> to vector<8x128xf32>
    %6 = arith.addf %3, %5 : vector<8x128xf32>
    %cst_5 = arith.constant 0.000000e+00 : f32
    %7 = vector.broadcast %cst_5 : f32 to vector<8x128xf32>
    %8 = arith.subf %7, %6 : vector<8x128xf32>
    %9 = math.exp %8 : vector<8x128xf32>
    %cst_6 = arith.constant 1.000000e+00 : f32
    %10 = vector.broadcast %cst_6 : f32 to vector<8x128xf32>
    %11 = arith.addf %10, %9 : vector<8x128xf32>
    %12 = tpu.reciprocal %11 {approx = true} : vector<8x128xf32> -> vector<8x128xf32>
    %13 = arith.truncf %12 : vector<8x128xf32> to vector<8x128xbf16>
    %c0_7 = arith.constant 0 : index
    %c0_8 = arith.constant 0 : index
    %14 = vector.load %arg4[%c0_7, %c0_8] : memref<128x128xbf16, #tpu.memory_space<vmem>>, vector<128x128xbf16>
    %cst_9 = arith.constant dense<0.000000e+00> : vector<8x128xf32>
    %15 = tpu.matmul %13, %14, %cst_9 {dimension_numbers = #tpu.dot_dimension_numbers<[1], [0], [0], [1], [0, 0, 1, 1], [], []>} : vector<8x128xbf16>, vector<128x128xbf16>, vector<8x128xf32> -> vector<8x128xf32>
    %c0_10 = arith.constant 0 : index
    %c0_11 = arith.constant 0 : index
    %16 = vector.load %arg5[%c0_10, %c0_11] : memref<1x128xf32, #tpu.memory_space<vmem>>, vector<1x128xf32>
    %17 = vector.broadcast %16 : vector<1x128xf32> to vector<8x128xf32>
    %18 = arith.addf %15, %17 : vector<8x128xf32>
    %cst_12 = arith.constant 0.000000e+00 : f32
    %19 = vector.broadcast %cst_12 : f32 to vector<8x128xf32>
    %20 = arith.subf %19, %18 : vector<8x128xf32>
    %21 = math.exp %20 : vector<8x128xf32>
    %cst_13 = arith.constant 1.000000e+00 : f32
    %22 = vector.broadcast %cst_13 : f32 to vector<8x128xf32>
    %23 = arith.addf %22, %21 : vector<8x128xf32>
    %24 = tpu.reciprocal %23 {approx = true} : vector<8x128xf32> -> vector<8x128xf32>
    %c0_14 = arith.constant 0 : index
    %c0_15 = arith.constant 0 : index
    %25 = vector.load %arg6[%c0_14, %c0_15] : memref<1x128xf32, #tpu.memory_space<vmem>>, vector<1x128xf32>
    %26 = vector.broadcast %25 : vector<1x128xf32> to vector<8x128xf32>
    %27 = arith.mulf %24, %26 : vector<8x128xf32>
    %cst_16 = arith.constant dense<0.000000e+00> : vector<8xf32>
    %28 = vector.multi_reduction <add>, %27, %cst_16 [1] : vector<8x128xf32> to vector<8xf32>
    %29 = vector.shape_cast %28 : vector<8xf32> to vector<8x1xf32>
    %c0_17 = arith.constant 0 : index
    %c0_18 = arith.constant 0 : index
    %30 = vector.load %arg7[%c0_17, %c0_18] : memref<8x1xf32, #tpu.memory_space<vmem>>, vector<8x1xf32>
    tpu.vector_store %arg7[%c0_17, %c0_18], %29 {strides = array<i32>} : memref<8x1xf32, #tpu.memory_space<vmem>>, vector<8x1xf32>,
    return
  }
  func.func @transform_0(%arg0: i32) -> (i32, i32) {
    %c0_i32 = arith.constant 0 : i32
    %c0_i32_0 = arith.constant 0 : i32
    return %arg0, %c0_i32 : i32, i32
  }
  func.func @transform_1(%arg0: i32) -> (i32, i32) {
    %c0_i32 = arith.constant 0 : i32
    %c0_i32_0 = arith.constant 0 : i32
    %c0_i32_1 = arith.constant 0 : i32
    return %c0_i32, %c0_i32_0 : i32, i32
  }
  func.func @transform_2(%arg0: i32) -> (i32, i32) {
    %c0_i32 = arith.constant 0 : i32
    %c0_i32_0 = arith.constant 0 : i32
    %c0_i32_1 = arith.constant 0 : i32
    return %c0_i32, %c0_i32_0 : i32, i32
  }
  func.func @transform_3(%arg0: i32) -> (i32, i32) {
    %c0_i32 = arith.constant 0 : i32
    %c0_i32_0 = arith.constant 0 : i32
    %c0_i32_1 = arith.constant 0 : i32
    return %c0_i32, %c0_i32_0 : i32, i32
  }
  func.func @transform_4(%arg0: i32) -> (i32, i32) {
    %c0_i32 = arith.constant 0 : i32
    %c0_i32_0 = arith.constant 0 : i32
    %c0_i32_1 = arith.constant 0 : i32
    return %c0_i32, %c0_i32_0 : i32, i32
  }
  func.func @transform_5(%arg0: i32) -> (i32, i32) {
    %c0_i32 = arith.constant 0 : i32
    %c0_i32_0 = arith.constant 0 : i32
    %c0_i32_1 = arith.constant 0 : i32
    return %c0_i32, %c0_i32_0 : i32, i32
  }
  func.func @transform_6(%arg0: i32) -> (i32, i32) {
    %c0_i32 = arith.constant 0 : i32
    %c0_i32_0 = arith.constant 0 : i32
    return %arg0, %c0_i32 : i32, i32
  }
}

</mosaic_0001>

<llo_original>
// kernel: tpu_custom_call.1
$region0: #{tpu_custom_call.1}
  #allocation0 [shape = 'u32[]', space=smem, size = 0x4, offset = 0x4, fixed_abs, tag = 'smem constant byte address 0x4 - core index']
  #allocation1 [shape = 'u32[144,128]{1,0:T(1,128)}', space=vmem, size = 0x12000, scoped, tag = 'internal scratch']
  %s0 = inlined_call_operand.hbm [shape: f32[8,16], index: 0, kind: input, shape index: {}]
  %s1 = inlined_call_operand.hbm [shape: bf16[16,128], index: 1, kind: input, shape index: {}]
  %s2 = inlined_call_operand.vmem [shape: f32[1,128], index: 2, kind: input, shape index: {}]
  %s3 = inlined_call_operand.hbm [shape: bf16[128,128], index: 3, kind: input, shape index: {}]
  %s4 = inlined_call_operand.vmem [shape: f32[1,128], index: 4, kind: input, shape index: {}]
  %s5 = inlined_call_operand.vmem [shape: f32[1,128], index: 5, kind: input, shape index: {}]
  %s6 = inlined_call_operand.vmem [shape: f32[8,1], index: 6, kind: output, shape index: {}]
  %s7 = sld [smem:[#allocation0]]
  $region46: #{tpu_custom_call.1} parent=0
    _
  %s9 = ssub.s32 1, %s7
  %s10 = scalar_select 0, %s9, %s7
  $region1: #{tpu_custom_call.1} parent=0
    #allocation2 [shape = 'u8[4096]{0}', space=vmem, size = 0x1000, scoped, tag = 'input window, operand 0, single buffered']
    #allocation3 [shape = 's32[1]{0}', space=sflag, size = 0x4, scoped, tag = 'scoped memory for tpu_custom_call.1']
    #allocation4 [shape = 'u8[4096]{0}', space=vmem, size = 0x1000, scoped, tag = 'input window, operand 1, single buffered']
    #allocation5 [shape = 's32[1]{0}', space=sflag, size = 0x4, scoped, tag = 'scoped memory for tpu_custom_call.1']
    #allocation6 [shape = 'u8[32768]{0}', space=vmem, size = 0x8000, scoped, tag = 'input window, operand 3, single buffered']
    %11 = vsyncpa [#allocation3], 0
    %12 = vsyncpa [#allocation5], 0
    // Predicated region
    $region2: #{tpu_custom_call.1} parent=1 // pred_check
      _
    $region3: #{tpu_custom_call.1} parent=1 // pred_check_branch
      %14 = sbr.rel (0) target = $region5
    $region4: #{tpu_custom_call.1} parent=1 // pred_region
      %s16 = ssub.s32 128, 128
      %17 = vsyncadd [#allocation3], %s16
      %s19 = sshll.u32 [#allocation2], 4
      %s20 = int_to_ptr.vmem [resolvable:$true] %s19
      %22 = dma.hbm_to_vmem [thread:$0]  %s0, 128, %s20, [#allocation3]
    $region5: #{tpu_custom_call.1} parent=1 // pred_fallthru
      _
    // Predicated region
    $region6: #{tpu_custom_call.1} parent=1 // pred_check
      _
    $region7: #{tpu_custom_call.1} parent=1 // pred_check_branch
      %24 = sbr.rel (0) target = $region9
    $region8: #{tpu_custom_call.1} parent=1 // pred_region
      %s26 = ssub.s32 128, 128
      %27 = vsyncadd [#allocation5], %s26
      %s28 = sshll.u32 [#allocation4], 4
      %s29 = int_to_ptr.vmem [resolvable:$true] %s28
      %34 = dma.hbm_to_vmem [thread:$0]  %s1, 128, %s29, [#allocation5], 64, 64, 4
    $region9: #{tpu_custom_call.1} parent=1 // pred_fallthru
      _
    // Predicated region
    $region10: #{tpu_custom_call.1} parent=1 // pred_check
      _
    $region11: #{tpu_custom_call.1} parent=1 // pred_check_branch
      %36 = sbr.rel (0) target = $region13
    $region12: #{tpu_custom_call.1} parent=1 // pred_region
      _
    $region13: #{tpu_custom_call.1} parent=1 // pred_fallthru
      _
    // Predicated region
    $region14: #{tpu_custom_call.1} parent=1 // pred_check
      _
    $region15: #{tpu_custom_call.1} parent=1 // pred_check_branch
      %38 = sbr.rel (0) target = $region17
    $region16: #{tpu_custom_call.1} parent=1 // pred_region
      %s40 = ssub.s32 1024, 1024
      %41 = vsyncadd [#allocation5], %s40
      %s42 = sshll.u32 [#allocation6], 4
      %s43 = int_to_ptr.vmem [resolvable:$true] %s42
      %48 = dma.hbm_to_vmem [thread:$0]  %s3, 1024, %s43, [#allocation5], 64, 64, 4
    $region17: #{tpu_custom_call.1} parent=1 // pred_fallthru
      _
    // Predicated region
    $region18: #{tpu_custom_call.1} parent=1 // pred_check
      _
    $region19: #{tpu_custom_call.1} parent=1 // pred_check_branch
      %50 = sbr.rel (0) target = $region21
    $region20: #{tpu_custom_call.1} parent=1 // pred_region
      _
    $region21: #{tpu_custom_call.1} parent=1 // pred_fallthru
      _
    // Predicated region
    $region22: #{tpu_custom_call.1} parent=1 // pred_check
      _
    $region23: #{tpu_custom_call.1} parent=1 // pred_check_branch
      %52 = sbr.rel (0) target = $region25
    $region24: #{tpu_custom_call.1} parent=1 // pred_region
      _
    $region25: #{tpu_custom_call.1} parent=1 // pred_fallthru
      _
    // Predicated region
    $region26: #{tpu_custom_call.1} parent=1 // pred_check
      _
    $region27: #{tpu_custom_call.1} parent=1 // pred_check_branch
      %54 = sbr.rel (0) target = $region29
    $region28: #{tpu_custom_call.1} parent=1 // pred_region
      %55 = dma.done [#allocation3], 128
    $region29: #{tpu_custom_call.1} parent=1 // pred_fallthru
      _
    // Predicated region
    $region30: #{tpu_custom_call.1} parent=1 // pred_check
      _
    $region31: #{tpu_custom_call.1} parent=1 // pred_check_branch
      %57 = sbr.rel (0) target = $region33
    $region32: #{tpu_custom_call.1} parent=1 // pred_region
      %58 = dma.done [#allocation5], 128
    $region33: #{tpu_custom_call.1} parent=1 // pred_fallthru
      _
    // Predicated region
    $region34: #{tpu_custom_call.1} parent=1 // pred_check
      _
    $region35: #{tpu_custom_call.1} parent=1 // pred_check_branch
      %60 = sbr.rel (0) target = $region37
    $region36: #{tpu_custom_call.1} parent=1 // pred_region
      %61 = dma.done [#allocation5], 1024
    $region37: #{tpu_custom_call.1} parent=1 // pred_fallthru
      _
    %v63 = vld [vmem:[#allocation2] sm:$0xff]
    %v64 = vpack.c.bf16 %v63, %v63
    %v65 = vld [vmem:[#allocation4] sm:$0xf]
    %v66 = vld [vmem:[#allocation4 + $0x4] sm:$0xf]
    %v67 = vld [vmem:[%s2] sm:$0x1]
    %v69 = vlaneseq
    %v70 = vshrl.u32 %v69, 7
    %v71 = vsub.s32 0, %v70
    %v72 = vrot.slane %v67, %v71
    %v76 = vunpack.c.l.b16 %v65
    %v77 = vunpack.c.l.b16 %v66
    %v78 = vpack.c.b16 %v77, %v76
    %vm80 = vcmask 130048
    %v82 = vsel %vm80, %v64, 0
    %84 = vmatprep.subr.bf16.mxu0 0
    %85 = vmatpush1.bf16.msra.mxu0 %v78
    %86 = vmatprep.subr.bf16.mxu0 0
    %87 = vmatpush1.bf16.msra.mxu0 0
    %88 = vmatprep.subr.bf16.mxu0 0
    %89 = vmatpush1.bf16.msra.mxu0 0
    %90 = vmatprep.subr.bf16.mxu0 0
    %91 = vmatpush1.bf16.msra.mxu0 0
    %92 = vmatprep.subr.bf16.mxu0 0
    %93 = vmatpush1.bf16.msra.mxu0 0
    %94 = vmatprep.subr.bf16.mxu0 0
    %95 = vmatpush1.bf16.msra.mxu0 0
    %96 = vmatprep.subr.bf16.mxu0 0
    %97 = vmatpush1.bf16.msra.mxu0 0
    %98 = vmatprep.subr.bf16.mxu0 0
    %99 = vmatpush1.bf16.msra.mxu0 0
    %100 = vmatprep.subr.bf16.mxu0 0
    %101 = vmatpush1.bf16.msra.mxu0 0
    %102 = vmatprep.subr.bf16.mxu0 0
    %103 = vmatpush1.bf16.msra.mxu0 0
    %104 = vmatprep.subr.bf16.mxu0 0
    %105 = vmatpush1.bf16.msra.mxu0 0
    %106 = vmatprep.subr.bf16.mxu0 0
    %107 = vmatpush1.bf16.msra.mxu0 0
    %108 = vmatprep.subr.bf16.mxu0 0
    %109 = vmatpush1.bf16.msra.mxu0 0
    %110 = vmatprep.subr.bf16.mxu0 0
    %111 = vmatpush1.bf16.msra.mxu0 0
    %112 = vmatprep.subr.bf16.mxu0 0
    %113 = vmatpush1.bf16.msra.mxu0 0
    %114 = vmatprep.subr.bf16.mxu0 0
    %115 = vmatpush1.bf16.msra.mxu0 0
    %116 = vmatprep.mubr.bf16.mxu0 0
    %117 = vmatmul.mubr.bf16.gmra.mrb[0].mxu0 %v82
    %v118 = vpop.f32.mrb[0].mxu0
    %v119 = vadd.f32 %v72, %v118
    %v120 = vpop.f32.mrb[0].mxu0
    %v121 = vpop.f32.mrb[0].mxu0
    %v122 = vpop.f32.mrb[0].mxu0
    %123 = vdwg.mxu0
    %v124 = vsub.f32 0.0, %v119
    %v125 = vmul.f32 %v124, 1.442695
    %v126 = vpow.pop %v125
    %v127 = vadd.f32 %v126, 1.0
    %v128 = vrcp.pop %v127
    %v129 = vpack.c.bf16 %v128, %v128
    %v130 = vld [vmem:[#allocation6] sm:$0xf]
    %v131 = vld [vmem:[#allocation6 + $0x4] sm:$0xf]
    %v132 = vld [vmem:[#allocation6 + $0x8] sm:$0xf]
    %v133 = vld [vmem:[#allocation6 + $0xc] sm:$0xf]
    %v134 = vld [vmem:[#allocation6 + $0x10] sm:$0xf]
    %v135 = vld [vmem:[#allocation6 + $0x14] sm:$0xf]
    %v136 = vld [vmem:[#allocation6 + $0x18] sm:$0xf]
    %v137 = vld [vmem:[#allocation6 + $0x1c] sm:$0xf]
    %v138 = vld [vmem:[#allocation6 + $0x20] sm:$0xf]
    %v139 = vld [vmem:[#allocation6 + $0x24] sm:$0xf]
    %v140 = vld [vmem:[#allocation6 + $0x28] sm:$0xf]
    %v141 = vld [vmem:[#allocation6 + $0x2c] sm:$0xf]
    %v142 = vld [vmem:[#allocation6 + $0x30] sm:$0xf]
    %v143 = vld [vmem:[#allocation6 + $0x34] sm:$0xf]
    %v144 = vld [vmem:[#allocation6 + $0x38] sm:$0xf]
    %v145 = vld [vmem:[#allocation6 + $0x3c] sm:$0xf]
    %v146 = vld [vmem:[%s4] sm:$0x1]
    %v148 = vlaneseq
    %v149 = vshrl.u32 %v148, 7
    %v150 = vsub.s32 0, %v149
    %v151 = vrot.slane %v146, %v150
    %v169 = vunpack.c.l.b16 %v130
    %v170 = vunpack.c.l.b16 %v131
    %v171 = vunpack.c.l.b16 %v132
    %v172 = vunpack.c.l.b16 %v133
    %v173 = vunpack.c.l.b16 %v134
    %v174 = vunpack.c.l.b16 %v135
    %v175 = vunpack.c.l.b16 %v136
    %v176 = vunpack.c.l.b16 %v137
    %v177 = vunpack.c.l.b16 %v138
    %v178 = vunpack.c.l.b16 %v139
    %v179 = vunpack.c.l.b16 %v140
    %v180 = vunpack.c.l.b16 %v141
    %v181 = vunpack.c.l.b16 %v142
    %v182 = vunpack.c.l.b16 %v143
    %v183 = vunpack.c.l.b16 %v144
    %v184 = vunpack.c.l.b16 %v145
    %v185 = vpack.c.b16 %v170, %v169
    %v186 = vpack.c.b16 %v172, %v171
    %v187 = vpack.c.b16 %v174, %v173
    %v188 = vpack.c.b16 %v176, %v175
    %v189 = vpack.c.b16 %v178, %v177
    %v190 = vpack.c.b16 %v180, %v179
    %v191 = vpack.c.b16 %v182, %v181
    %v192 = vpack.c.b16 %v184, %v183
    %201 = vmatprep.subr.bf16.mxu0 0
    %202 = vmatpush1.bf16.msra.mxu0 %v185
    %203 = vmatprep.subr.bf16.mxu0 0
    %204 = vmatpush1.bf16.msra.mxu0 %v186
    %205 = vmatprep.subr.bf16.mxu0 0
    %206 = vmatpush1.bf16.msra.mxu0 %v187
    %207 = vmatprep.subr.bf16.mxu0 0
    %208 = vmatpush1.bf16.msra.mxu0 %v188
    %209 = vmatprep.subr.bf16.mxu0 0
    %210 = vmatpush1.bf16.msra.mxu0 %v189
    %211 = vmatprep.subr.bf16.mxu0 0
    %212 = vmatpush1.bf16.msra.mxu0 %v190
    %213 = vmatprep.subr.bf16.mxu0 0
    %214 = vmatpush1.bf16.msra.mxu0 %v191
    %215 = vmatprep.subr.bf16.mxu0 0
    %216 = vmatpush1.bf16.msra.mxu0 %v192
    %217 = vmatprep.subr.bf16.mxu0 0
    %218 = vmatpush1.bf16.msra.mxu0 0
    %219 = vmatprep.subr.bf16.mxu0 0
    %220 = vmatpush1.bf16.msra.mxu0 0
    %221 = vmatprep.subr.bf16.mxu0 0
    %222 = vmatpush1.bf16.msra.mxu0 0
    %223 = vmatprep.subr.bf16.mxu0 0
    %224 = vmatpush1.bf16.msra.mxu0 0
    %225 = vmatprep.subr.bf16.mxu0 0
    %226 = vmatpush1.bf16.msra.mxu0 0
    %227 = vmatprep.subr.bf16.mxu0 0
    %228 = vmatpush1.bf16.msra.mxu0 0
    %229 = vmatprep.subr.bf16.mxu0 0
    %230 = vmatpush1.bf16.msra.mxu0 0
    %231 = vmatprep.subr.bf16.mxu0 0
    %232 = vmatpush1.bf16.msra.mxu0 0
    %233 = vmatprep.mubr.bf16.mxu0 0
    %234 = vmatmul.mubr.bf16.gmra.mrb[0].mxu0 %v129
    %v235 = vpop.f32.mrb[0].mxu0
    %v236 = vadd.f32 %v151, %v235
    %v237 = vpop.f32.mrb[0].mxu0
    %v238 = vpop.f32.mrb[0].mxu0
    %v239 = vpop.f32.mrb[0].mxu0
    %240 = vdwg.mxu0
    %v241 = vsub.f32 0.0, %v236
    %v242 = vmul.f32 %v241, 1.442695
    %v243 = vpow.pop %v242
    %v244 = vadd.f32 %v243, 1.0
    %v245 = vrcp.pop %v244
    %v246 = vld [vmem:[%s5] sm:$0x1]
    %v248 = vlaneseq
    %v249 = vshrl.u32 %v248, 7
    %v250 = vsub.s32 0, %v249
    %v251 = vrot.slane %v246, %v250
    %v253 = vmul.f32 %v245, %v251
    %254 = vadd.xlane.f32.xlu0 %v253
    %v255 = vpop.xlane.xlu0 %254
    %vm256 = vcmask 7168
    %257 = vst.msk [vmem:[%s6] sm:$0xff] %vm256, %v255
    // Predicated region
    $region38: #{tpu_custom_call.1} parent=1 // pred_check
      _
    $region39: #{tpu_custom_call.1} parent=1 // pred_check_branch
      %259 = sbr.rel (0) target = $region41
    $region40: #{tpu_custom_call.1} parent=1 // pred_region
      _
    $region41: #{tpu_custom_call.1} parent=1 // pred_fallthru
      _
    // Predicated region
    $region42: #{tpu_custom_call.1} parent=1 // pred_check
      _
    $region43: #{tpu_custom_call.1} parent=1 // pred_check_branch
      %261 = sbr.rel (0) target = $region45
    $region44: #{tpu_custom_call.1} parent=1 // pred_region
      _
    $region45: #{tpu_custom_call.1} parent=1 // pred_fallthru
      _
    %262 = vsyncpa [#allocation3], 1
    %263 = vsyncpa [#allocation5], 1

// kernel: tpu_custom_call.1
$region0: #{tpu_custom_call.1}
  #allocation0 [shape = 'u32[]', space=smem, size = 0x4, offset = 0x4, fixed_abs, tag = 'smem constant byte address 0x4 - core index']
  #allocation1 [shape = 'u32[144,128]{1,0:T(1,128)}', space=vmem, size = 0x12000, scoped, tag = 'internal scratch']
  %s0 = inlined_call_operand.hbm [shape: f32[8,16], index: 0, kind: input, shape index: {}]
  %s1 = inlined_call_operand.hbm [shape: bf16[16,128], index: 1, kind: input, shape index: {}]
  %s2 = inlined_call_operand.vmem [shape: f32[1,128], index: 2, kind: input, shape index: {}]
  %s3 = inlined_call_operand.hbm [shape: bf16[128,128], index: 3, kind: input, shape index: {}]
  %s4 = inlined_call_operand.vmem [shape: f32[1,128], index: 4, kind: input, shape index: {}]
  %s5 = inlined_call_operand.vmem [shape: f32[1,128], index: 5, kind: input, shape index: {}]
  %s6 = inlined_call_operand.vmem [shape: f32[8,1], index: 6, kind: output, shape index: {}]
  %s7 = sld [smem:[#allocation0]]
  $region46: #{tpu_custom_call.1} parent=0
    _
  %s9 = ssub.s32 1, %s7
  %s10 = scalar_select 0, %s9, %s7
  $region1: #{tpu_custom_call.1} parent=0
    #allocation2 [shape = 'u8[4096]{0}', space=vmem, size = 0x1000, scoped, tag = 'input window, operand 0, single buffered']
    #allocation3 [shape = 's32[1]{0}', space=sflag, size = 0x4, scoped, tag = 'scoped memory for tpu_custom_call.1']
    #allocation4 [shape = 'u8[4096]{0}', space=vmem, size = 0x1000, scoped, tag = 'input window, operand 1, single buffered']
    #allocation5 [shape = 's32[1]{0}', space=sflag, size = 0x4, scoped, tag = 'scoped memory for tpu_custom_call.1']
    #allocation6 [shape = 'u8[32768]{0}', space=vmem, size = 0x8000, scoped, tag = 'input window, operand 3, single buffered']
    %11 = vsyncpa [#allocation3], 0
    %12 = vsyncpa [#allocation5], 0
    // Predicated region
    $region2: #{tpu_custom_call.1} parent=1 // pred_check
      _
    $region3: #{tpu_custom_call.1} parent=1 // pred_check_branch
      %14 = sbr.rel (0) target = $region5
    $region4: #{tpu_custom_call.1} parent=1 // pred_region
      %s16 = ssub.s32 128, 128
      %17 = vsyncadd [#allocation3], %s16
      %s19 = sshll.u32 [#allocation2], 4
      %s20 = int_to_ptr.vmem [resolvable:$true] %s19
      %22 = dma.hbm_to_vmem [thread:$0]  %s0, 128, %s20, [#allocation3]
    $region5: #{tpu_custom_call.1} parent=1 // pred_fallthru
      _
    // Predicated region
    $region6: #{tpu_custom_call.1} parent=1 // pred_check
      _
    $region7: #{tpu_custom_call.1} parent=1 // pred_check_branch
      %24 = sbr.rel (0) target = $region9
    $region8: #{tpu_custom_call.1} parent=1 // pred_region
      %s26 = ssub.s32 128, 128
      %27 = vsyncadd [#allocation5], %s26
      %s28 = sshll.u32 [#allocation4], 4
      %s29 = int_to_ptr.vmem [resolvable:$true] %s28
      %34 = dma.hbm_to_vmem [thread:$0]  %s1, 128, %s29, [#allocation5], 64, 64, 4
    $region9: #{tpu_custom_call.1} parent=1 // pred_fallthru
      _
    // Predicated region
    $region10: #{tpu_custom_call.1} parent=1 // pred_check
      _
    $region11: #{tpu_custom_call.1} parent=1 // pred_check_branch
      %36 = sbr.rel (0) target = $region13
    $region12: #{tpu_custom_call.1} parent=1 // pred_region
      _
    $region13: #{tpu_custom_call.1} parent=1 // pred_fallthru
      _
    // Predicated region
    $region14: #{tpu_custom_call.1} parent=1 // pred_check
      _
    $region15: #{tpu_custom_call.1} parent=1 // pred_check_branch
      %38 = sbr.rel (0) target = $region17
    $region16: #{tpu_custom_call.1} parent=1 // pred_region
      %s40 = ssub.s32 1024, 1024
      %41 = vsyncadd [#allocation5], %s40
      %s42 = sshll.u32 [#allocation6], 4
      %s43 = int_to_ptr.vmem [resolvable:$true] %s42
      %48 = dma.hbm_to_vmem [thread:$0]  %s3, 1024, %s43, [#allocation5], 64, 64, 4
    $region17: #{tpu_custom_call.1} parent=1 // pred_fallthru
      _
    // Predicated region
    $region18: #{tpu_custom_call.1} parent=1 // pred_check
      _
    $region19: #{tpu_custom_call.1} parent=1 // pred_check_branch
      %50 = sbr.rel (0) target = $region21
    $region20: #{tpu_custom_call.1} parent=1 // pred_region
      _
    $region21: #{tpu_custom_call.1} parent=1 // pred_fallthru
      _
    // Predicated region
    $region22: #{tpu_custom_call.1} parent=1 // pred_check
      _
    $region23: #{tpu_custom_call.1} parent=1 // pred_check_branch
      %52 = sbr.rel (0) target = $region25
    $region24: #{tpu_custom_call.1} parent=1 // pred_region
      _
    $region25: #{tpu_custom_call.1} parent=1 // pred_fallthru
      _
    // Predicated region
    $region26: #{tpu_custom_call.1} parent=1 // pred_check
      _
    $region27: #{tpu_custom_call.1} parent=1 // pred_check_branch
      %54 = sbr.rel (0) target = $region29
    $region28: #{tpu_custom_call.1} parent=1 // pred_region
      %55 = dma.done [#allocation3], 128
    $region29: #{tpu_custom_call.1} parent=1 // pred_fallthru
      _
    // Predicated region
    $region30: #{tpu_custom_call.1} parent=1 // pred_check
      _
    $region31: #{tpu_custom_call.1} parent=1 // pred_check_branch
      %57 = sbr.rel (0) target = $region33
    $region32: #{tpu_custom_call.1} parent=1 // pred_region
      %58 = dma.done [#allocation5], 128
    $region33: #{tpu_custom_call.1} parent=1 // pred_fallthru
      _
    // Predicated region
    $region34: #{tpu_custom_call.1} parent=1 // pred_check
      _
    $region35: #{tpu_custom_call.1} parent=1 // pred_check_branch
      %60 = sbr.rel (0) target = $region37
    $region36: #{tpu_custom_call.1} parent=1 // pred_region
      %61 = dma.done [#allocation5], 1024
    $region37: #{tpu_custom_call.1} parent=1 // pred_fallthru
      _
    %v63 = vld [vmem:[#allocation2] sm:$0xff]
    %v64 = vpack.c.bf16 %v63, %v63
    %v65 = vld [vmem:[#allocation4] sm:$0xf]
    %v66 = vld [vmem:[#allocation4 + $0x4] sm:$0xf]
    %v67 = vld [vmem:[%s2] sm:$0x1]
    %v69 = vlaneseq
    %v70 = vshrl.u32 %v69, 7
    %v71 = vsub.s32 0, %v70
    %v72 = vrot.slane %v67, %v71
    %v76 = vunpack.c.l.b16 %v65
    %v77 = vunpack.c.l.b16 %v66
    %v78 = vpack.c.b16 %v77, %v76
    %vm80 = vcmask 130048
    %v82 = vsel %vm80, %v64, 0
    %84 = vmatprep.subr.bf16.mxu0 0
    %85 = vmatpush1.bf16.msra.mxu0 %v78
    %86 = vmatprep.subr.bf16.mxu0 0
    %87 = vmatpush1.bf16.msra.mxu0 0
    %88 = vmatprep.subr.bf16.mxu0 0
    %89 = vmatpush1.bf16.msra.mxu0 0
    %90 = vmatprep.subr.bf16.mxu0 0
    %91 = vmatpush1.bf16.msra.mxu0 0
    %92 = vmatprep.subr.bf16.mxu0 0
    %93 = vmatpush1.bf16.msra.mxu0 0
    %94 = vmatprep.subr.bf16.mxu0 0
    %95 = vmatpush1.bf16.msra.mxu0 0
    %96 = vmatprep.subr.bf16.mxu0 0
    %97 = vmatpush1.bf16.msra.mxu0 0
    %98 = vmatprep.subr.bf16.mxu0 0
    %99 = vmatpush1.bf16.msra.mxu0 0
    %100 = vmatprep.subr.bf16.mxu0 0
    %101 = vmatpush1.bf16.msra.mxu0 0
    %102 = vmatprep.subr.bf16.mxu0 0
    %103 = vmatpush1.bf16.msra.mxu0 0
    %104 = vmatprep.subr.bf16.mxu0 0
    %105 = vmatpush1.bf16.msra.mxu0 0
    %106 = vmatprep.subr.bf16.mxu0 0
    %107 = vmatpush1.bf16.msra.mxu0 0
    %108 = vmatprep.subr.bf16.mxu0 0
    %109 = vmatpush1.bf16.msra.mxu0 0
    %110 = vmatprep.subr.bf16.mxu0 0
    %111 = vmatpush1.bf16.msra.mxu0 0
    %112 = vmatprep.subr.bf16.mxu0 0
    %113 = vmatpush1.bf16.msra.mxu0 0
    %114 = vmatprep.subr.bf16.mxu0 0
    %115 = vmatpush1.bf16.msra.mxu0 0
    %116 = vmatprep.mubr.bf16.mxu0 0
    %117 = vmatmul.mubr.bf16.gmra.mrb[0].mxu0 %v82
    %v118 = vpop.f32.mrb[0].mxu0
    %v119 = vadd.f32 %v72, %v118
    %v120 = vpop.f32.mrb[0].mxu0
    %v121 = vpop.f32.mrb[0].mxu0
    %v122 = vpop.f32.mrb[0].mxu0
    %123 = vdwg.mxu0
    %v124 = vsub.f32 0.0, %v119
    %v125 = vmul.f32 %v124, 1.442695
    %v126 = vpow.pop %v125
    %v127 = vadd.f32 %v126, 1.0
    %v128 = vrcp.pop %v127
    %v129 = vpack.c.bf16 %v128, %v128
    %v130 = vld [vmem:[#allocation6] sm:$0xf]
    %v131 = vld [vmem:[#allocation6 + $0x4] sm:$0xf]
    %v132 = vld [vmem:[#allocation6 + $0x8] sm:$0xf]
    %v133 = vld [vmem:[#allocation6 + $0xc] sm:$0xf]
    %v134 = vld [vmem:[#allocation6 + $0x10] sm:$0xf]
    %v135 = vld [vmem:[#allocation6 + $0x14] sm:$0xf]
    %v136 = vld [vmem:[#allocation6 + $0x18] sm:$0xf]
    %v137 = vld [vmem:[#allocation6 + $0x1c] sm:$0xf]
    %v138 = vld [vmem:[#allocation6 + $0x20] sm:$0xf]
    %v139 = vld [vmem:[#allocation6 + $0x24] sm:$0xf]
    %v140 = vld [vmem:[#allocation6 + $0x28] sm:$0xf]
    %v141 = vld [vmem:[#allocation6 + $0x2c] sm:$0xf]
    %v142 = vld [vmem:[#allocation6 + $0x30] sm:$0xf]
    %v143 = vld [vmem:[#allocation6 + $0x34] sm:$0xf]
    %v144 = vld [vmem:[#allocation6 + $0x38] sm:$0xf]
    %v145 = vld [vmem:[#allocation6 + $0x3c] sm:$0xf]
    %v146 = vld [vmem:[%s4] sm:$0x1]
    %v148 = vlaneseq
    %v149 = vshrl.u32 %v148, 7
    %v150 = vsub.s32 0, %v149
    %v151 = vrot.slane %v146, %v150
    %v169 = vunpack.c.l.b16 %v130
    %v170 = vunpack.c.l.b16 %v131
    %v171 = vunpack.c.l.b16 %v132
    %v172 = vunpack.c.l.b16 %v133
    %v173 = vunpack.c.l.b16 %v134
    %v174 = vunpack.c.l.b16 %v135
    %v175 = vunpack.c.l.b16 %v136
    %v176 = vunpack.c.l.b16 %v137
    %v177 = vunpack.c.l.b16 %v138
    %v178 = vunpack.c.l.b16 %v139
    %v179 = vunpack.c.l.b16 %v140
    %v180 = vunpack.c.l.b16 %v141
    %v181 = vunpack.c.l.b16 %v142
    %v182 = vunpack.c.l.b16 %v143
    %v183 = vunpack.c.l.b16 %v144
    %v184 = vunpack.c.l.b16 %v145
    %v185 = vpack.c.b16 %v170, %v169
    %v186 = vpack.c.b16 %v172, %v171
    %v187 = vpack.c.b16 %v174, %v173
    %v188 = vpack.c.b16 %v176, %v175
    %v189 = vpack.c.b16 %v178, %v177
    %v190 = vpack.c.b16 %v180, %v179
    %v191 = vpack.c.b16 %v182, %v181
    %v192 = vpack.c.b16 %v184, %v183
    %201 = vmatprep.subr.bf16.mxu0 0
    %202 = vmatpush1.bf16.msra.mxu0 %v185
    %203 = vmatprep.subr.bf16.mxu0 0
    %204 = vmatpush1.bf16.msra.mxu0 %v186
    %205 = vmatprep.subr.bf16.mxu0 0
    %206 = vmatpush1.bf16.msra.mxu0 %v187
    %207 = vmatprep.subr.bf16.mxu0 0
    %208 = vmatpush1.bf16.msra.mxu0 %v188
    %209 = vmatprep.subr.bf16.mxu0 0
    %210 = vmatpush1.bf16.msra.mxu0 %v189
    %211 = vmatprep.subr.bf16.mxu0 0
    %212 = vmatpush1.bf16.msra.mxu0 %v190
    %213 = vmatprep.subr.bf16.mxu0 0
    %214 = vmatpush1.bf16.msra.mxu0 %v191
    %215 = vmatprep.subr.bf16.mxu0 0
    %216 = vmatpush1.bf16.msra.mxu0 %v192
    %217 = vmatprep.subr.bf16.mxu0 0
    %218 = vmatpush1.bf16.msra.mxu0 0
    %219 = vmatprep.subr.bf16.mxu0 0
    %220 = vmatpush1.bf16.msra.mxu0 0
    %221 = vmatprep.subr.bf16.mxu0 0
    %222 = vmatpush1.bf16.msra.mxu0 0
    %223 = vmatprep.subr.bf16.mxu0 0
    %224 = vmatpush1.bf16.msra.mxu0 0
    %225 = vmatprep.subr.bf16.mxu0 0
    %226 = vmatpush1.bf16.msra.mxu0 0
    %227 = vmatprep.subr.bf16.mxu0 0
    %228 = vmatpush1.bf16.msra.mxu0 0
    %229 = vmatprep.subr.bf16.mxu0 0
    %230 = vmatpush1.bf16.msra.mxu0 0
    %231 = vmatprep.subr.bf16.mxu0 0
    %232 = vmatpush1.bf16.msra.mxu0 0
    %233 = vmatprep.mubr.bf16.mxu0 0
    %234 = vmatmul.mubr.bf16.gmra.mrb[0].mxu0 %v129
    %v235 = vpop.f32.mrb[0].mxu0
    %v236 = vadd.f32 %v151, %v235
    %v237 = vpop.f32.mrb[0].mxu0
    %v238 = vpop.f32.mrb[0].mxu0
    %v239 = vpop.f32.mrb[0].mxu0
    %240 = vdwg.mxu0
    %v241 = vsub.f32 0.0, %v236
    %v242 = vmul.f32 %v241, 1.442695
    %v243 = vpow.pop %v242
    %v244 = vadd.f32 %v243, 1.0
    %v245 = vrcp.pop %v244
    %v246 = vld [vmem:[%s5] sm:$0x1]
    %v248 = vlaneseq
    %v249 = vshrl.u32 %v248, 7
    %v250 = vsub.s32 0, %v249
    %v251 = vrot.slane %v246, %v250
    %v253 = vmul.f32 %v245, %v251
    %254 = vadd.xlane.f32.xlu0 %v253
    %v255 = vpop.xlane.xlu0 %254
    %vm256 = vcmask 7168
    %257 = vst.msk [vmem:[%s6] sm:$0xff] %vm256, %v255
    // Predicated region
    $region38: #{tpu_custom_call.1} parent=1 // pred_check
      _
    $region39: #{tpu_custom_call.1} parent=1 // pred_check_branch
      %259 = sbr.rel (0) target = $region41
    $region40: #{tpu_custom_call.1} parent=1 // pred_region
      _
    $region41: #{tpu_custom_call.1} parent=1 // pred_fallthru
      _
    // Predicated region
    $region42: #{tpu_custom_call.1} parent=1 // pred_check
      _
    $region43: #{tpu_custom_call.1} parent=1 // pred_check_branch
      %261 = sbr.rel (0) target = $region45
    $region44: #{tpu_custom_call.1} parent=1 // pred_region
      _
    $region45: #{tpu_custom_call.1} parent=1 // pred_fallthru
      _
    %262 = vsyncpa [#allocation3], 1
    %263 = vsyncpa [#allocation5], 1

</llo_original>
